<compile_context>
chip_gen: v5e
topology: v5e:2x2
jax: 0.10.0
libtpu: 0.0.40
codegen_flags: <defaults>
</compile_context>

<pallas_src>
import jax
import jax.numpy as jnp
from jax.experimental import pallas as pl
from jax.experimental.pallas import tpu as pltpu

_LANE = 128
_MIN_SPLIT_BYTES = 512 * 1024      # below this, one block (per-step overhead wins)
_SMALL_RAGGED_BYTES = 512 * 1024   # below this, pad/slice overhead is negligible


def _hardswish_kernel(x_ref, o_ref):
    x = x_ref[...]
    relu6 = jnp.clip(x + 3.0, 0.0, 6.0)       # relu6(x + 3)
    o_ref[...] = x * relu6 * (1.0 / 6.0)       # constant multiply, not a divide


def _hardswish_jnp(x):
    return x * jnp.clip(x + 3.0, 0.0, 6.0) * (1.0 / 6.0)


def _device_tuning():
    """(target_block_bytes, vmem_limit_bytes) tuned per TPU generation."""
    try:
        kind = jax.devices()[0].device_kind.lower()
    except Exception:
        kind = ""
    older = any(tag in kind for tag in ("v2", "v3", "v4", "v5"))
    if kind == "" or older:
        # v5e: 16 MiB scoped-VMEM default -> ~2 MiB blocks x 4 buffers = 8 MiB.
        return 2 * 1024 * 1024, None
    # v6e / v7x / newer: ~4 MiB blocks x 4 buffers = 16 MiB; raise the scoped
    # limit explicitly (well under 128 MiB / 64 MiB physical VMEM).
    return 4 * 1024 * 1024, 32 * 1024 * 1024


def _choose_tiling(n_elems, itemsize, target_block_bytes):
    """Pick (lane, rows, tile_rows, grid) for a lane-dense 2D slab of n_elems."""
    # Widest power-of-two lane width (multiple of 128) dividing n:
    # wider unmasked vst, fewer DMA descriptors.
    lane = _LANE
    for cand in (1024, 512, 256):
        if n_elems % cand == 0:
            lane = cand
            break
    rows = n_elems // lane

    # Sublane multiple: 8 for 32-bit, 16 for bf16, 32 for int8/fp8.
    sub = 8 * max(1, 4 // itemsize)
    total_bytes = n_elems * itemsize

    # Tiny tensors: one full-extent block; the ~0.35us/step grid overhead would
    # dominate any pipelining win.
    if total_bytes <= _MIN_SPLIT_BYTES or rows <= sub:
        return lane, rows, rows, 1

    unit_bytes = sub * lane * itemsize        # bytes per sublane-aligned row group
    m = pl.cdiv(rows, sub)                    # number of such units

    # Units per block: cap at the per-generation target AND at ~total/4 so
    # mid-size tensors still get >=2-4 pipelined steps.
    eff_target = min(target_block_bytes, max(unit_bytes, total_bytes // 4))
    k0 = max(1, min(eff_target // unit_bytes, m - 1))

    # Prefer an even grid so the 1-D "parallel" axis shards evenly across the
    # two TensorCores on v7x.  Bounded search around the target block size.
    k = k0
    for dk in range(9):
        cands = (k0,) if dk == 0 else (k0 - dk, k0 + dk)
        hit = None
        for c in cands:
            if 1 <= c <= m - 1 and pl.cdiv(m, c) % 2 == 0:
                hit = c
                break
        if hit is not None:
            k = hit
            break

    tile_rows = k * sub
    grid = pl.cdiv(rows, tile_rows)
    return lane, rows, tile_rows, grid


def _call_kernel(x2d, tile_rows, lane, grid, alias_input, vmem_limit_bytes):
    n = x2d.size
    itemsize = jnp.dtype(x2d.dtype).itemsize
    kwargs = {}
    if alias_input:
        # sparseml inplace=True: alias the (donatable) input buffer as the
        # output buffer.  JAX arrays stay immutable; donation under jit makes
        # the buffer reuse real.
        kwargs["input_output_aliases"] = {0: 0}
    cp = dict(dimension_semantics=("parallel",))
    if vmem_limit_bytes is not None:
        cp["vmem_limit_bytes"] = vmem_limit_bytes
    return pl.pallas_call(
        _hardswish_kernel,
        out_shape=jax.ShapeDtypeStruct(x2d.shape, x2d.dtype),
        grid_spec=pltpu.PrefetchScalarGridSpec(
            num_scalar_prefetch=0,
            grid=(grid,),
            in_specs=[pl.BlockSpec((tile_rows, lane), lambda i: (i, 0))],
            out_specs=pl.BlockSpec((tile_rows, lane), lambda i: (i, 0)),
        ),
        compiler_params=pltpu.CompilerParams(**cp),
        # Pure-bandwidth op: let XLA's scheduler overlap it with neighbors.
        cost_estimate=pl.CostEstimate(
            flops=5 * n, transcendentals=0, bytes_accessed=2 * n * itemsize),
        **kwargs,
    )(x2d)


def hardswish(x: jnp.ndarray, inplace: bool = False) -> jnp.ndarray:
    """Elementwise hardswish matching sparseml's hard_swish:
    0 for x <= -3, x for x >= 3, x*(x+3)/6 otherwise.
    """
    # TODO(synk): true in-place mutation of the caller's tensor has no JAX
    # equivalent; input_output_aliases + buffer donation is the closest analogue.
    orig_shape = x.shape
    n = x.size
    if n == 0:
        return x
    itemsize = jnp.dtype(x.dtype).itemsize
    target_bytes, vmem_limit = _device_tuning()

    if n % _LANE == 0:
        # Fast path (every normal NN activation): free reshape to a lane-dense
        # 2D slab, one pallas_call, free reshape back.  Zero padding / slicing.
        lane, rows, tile_rows, grid = _choose_tiling(n, itemsize, target_bytes)
        out2d = _call_kernel(x.reshape(rows, lane), tile_rows, lane, grid,
                             inplace, vmem_limit)
        return out2d.reshape(orig_shape)

    # Ragged tail (n % 128 != 0) — rare for NN activations.
    flat = x.reshape(-1)
    if n * itemsize <= _SMALL_RAGGED_BYTES or n < _LANE:
        # Tiny ragged tensor: pad/slice overhead is negligible; keep the
        # simple proven path (hardswish(0) = 0, padded lanes sliced off).
        padded_n = pl.cdiv(n, _LANE) * _LANE
        padded = jnp.pad(flat, (0, padded_n - n))
        lane, rows, tile_rows, grid = _choose_tiling(padded_n, itemsize, target_bytes)
        out2d = _call_kernel(padded.reshape(rows, lane), tile_rows, lane, grid,
                             False, vmem_limit)
        return out2d.reshape(-1)[:n].reshape(orig_shape)

    # Large ragged tensor: run the 128-aligned prefix through the fast path and
    # the <128-element tail through plain jnp, avoiding a kernel pass over
    # padded data.  (The stitch still costs one extra pass over the prefix.)
    n_main = (n // _LANE) * _LANE
    lane, rows, tile_rows, grid = _choose_tiling(n_main, itemsize, target_bytes)
    main_out = _call_kernel(flat[:n_main].reshape(rows, lane), tile_rows, lane,
                            grid, False, vmem_limit).reshape(-1)
    tail_out = _hardswish_jnp(flat[n_main:]).astype(x.dtype)
    return jnp.concatenate([main_out, tail_out]).reshape(orig_shape)


class Hardswish:
    """Module-style wrapper mirroring sparseml.pytorch.nn.Hardswish."""

    def __init__(self, num_channels: int = -1, inplace: bool = False):
        self.num_channels = num_channels
        self.inplace = inplace

    def __call__(self, x: jnp.ndarray) -> jnp.ndarray:
        return hardswish(x, self.inplace)


if __name__ == "__main__":
    key = jax.random.PRNGKey(0)
    k0, k1, k2 = jax.random.split(key, 3)

    # NCHW activation, matching PyTorch conv usage: batch=2, channels=4, 16x16.
    x = jax.random.normal(k0, (2, 4, 16, 16), dtype=jnp.float32) * 4.0
    out = Hardswish()(x)
    jax.block_until_ready(out)
    assert out.shape == x.shape and out.dtype == x.dtype
    assert jnp.allclose(out, _hardswish_jnp(x), atol=1e-6, rtol=1e-5)

    # Mid-size tensor (1 MiB): exercises the multi-block pipelined path
    # with an even grid length.
    x_mid = jax.random.normal(k1, (4, 64, 32, 32), dtype=jnp.float32) * 4.0
    out_mid = hardswish(x_mid)
    jax.block_until_ready(out_mid)
    assert out_mid.shape == x_mid.shape and out_mid.dtype == x_mid.dtype
    assert jnp.allclose(out_mid, _hardswish_jnp(x_mid), atol=1e-6, rtol=1e-5)

    # Ragged tail (N not a multiple of 128): exercises the fallback path.
    x_rag = jax.random.normal(k2, (3, 5, 7), dtype=jnp.float32) * 4.0
    out_rag = hardswish(x_rag)
    jax.block_until_ready(out_rag)
    assert out_rag.shape == x_rag.shape and out_rag.dtype == x_rag.dtype
    assert jnp.allclose(out_rag, _hardswish_jnp(x_rag), atol=1e-6, rtol=1e-5)

    print("KERNEL_OK")
</pallas_src>

<mosaic_0001>
module attributes {stable_mosaic.version = 11 : i64} {
  func.func @_hardswish_kernel(%arg0: i32, %arg1: memref<2x1024xf32, #tpu.memory_space<vmem>>, %arg2: memref<2x1024xf32, #tpu.memory_space<vmem>>) attributes {dimension_semantics = [#tpu.dimension_semantics<parallel>], iteration_bounds = array<i64: 1>, scalar_prefetch = 0 : i64, scratch_operands = 0 : i64, tpu.core_type = #tpu.core_type<tc>, window_params = [{transform_indices = @transform_0, window_bounds = array<i64: 2, 1024>}, {transform_indices = @transform_1, window_bounds = array<i64: 2, 1024>}]} {
    %c0 = arith.constant 0 : index
    %c0_0 = arith.constant 0 : index
    %0 = vector.load %arg1[%c0, %c0_0] : memref<2x1024xf32, #tpu.memory_space<vmem>>, vector<2x1024xf32>
    %cst = arith.constant 3.000000e+00 : f32
    %1 = vector.broadcast %cst : f32 to vector<2x1024xf32>
    %2 = arith.addf %0, %1 : vector<2x1024xf32>
    %cst_1 = arith.constant 0.000000e+00 : f32
    %cst_2 = arith.constant 6.000000e+00 : f32
    %3 = vector.broadcast %cst_1 : f32 to vector<2x1024xf32>
    %4 = arith.maximumf %3, %2 : vector<2x1024xf32>
    %5 = vector.broadcast %cst_2 : f32 to vector<2x1024xf32>
    %6 = arith.minimumf %5, %4 : vector<2x1024xf32>
    %7 = arith.mulf %0, %6 : vector<2x1024xf32>
    %cst_3 = arith.constant 0.166666672 : f32
    %8 = vector.broadcast %cst_3 : f32 to vector<2x1024xf32>
    %9 = arith.mulf %7, %8 : vector<2x1024xf32>
    %c0_4 = arith.constant 0 : index
    %c0_5 = arith.constant 0 : index
    %10 = vector.load %arg2[%c0_4, %c0_5] : memref<2x1024xf32, #tpu.memory_space<vmem>>, vector<2x1024xf32>
    tpu.vector_store %arg2[%c0_4, %c0_5], %9 {strides = array<i32>} : memref<2x1024xf32, #tpu.memory_space<vmem>>, vector<2x1024xf32>,
    return
  }
  func.func @transform_0(%arg0: i32) -> (i32, i32) {
    %c0_i32 = arith.constant 0 : i32
    %c0_i32_0 = arith.constant 0 : i32
    return %arg0, %c0_i32 : i32, i32
  }
  func.func @transform_1(%arg0: i32) -> (i32, i32) {
    %c0_i32 = arith.constant 0 : i32
    %c0_i32_0 = arith.constant 0 : i32
    return %arg0, %c0_i32 : i32, i32
  }
}

</mosaic_0001>

<llo_original>
// kernel: tpu_custom_call.1
$region0: #{tpu_custom_call.1}
  #allocation0 [shape = 'u32[]', space=smem, size = 0x4, offset = 0x4, fixed_abs, tag = 'smem constant byte address 0x4 - core index']
  #allocation1 [shape = 'u32[72,128]{1,0:T(1,128)}', space=vmem, size = 0x9000, scoped, tag = 'internal scratch']
  %s0 = inlined_call_operand.hbm [shape: f32[2,1024], index: 0, kind: input, shape index: {}]
  %s1 = inlined_call_operand.hbm [shape: f32[2,1024], index: 1, kind: output, shape index: {}]
  %s2 = sld [smem:[#allocation0]]
  $region18: #{tpu_custom_call.1} parent=0
    _
  %s4 = ssub.s32 1, %s2
  %s5 = scalar_select 0, %s4, %s2
  $region1: #{tpu_custom_call.1} parent=0
    #allocation2 [shape = 'u8[8192]{0}', space=vmem, size = 0x2000, scoped, tag = 'input window, operand 0, single buffered']
    #allocation3 [shape = 's32[1]{0}', space=sflag, size = 0x4, scoped, tag = 'scoped memory for tpu_custom_call.1']
    #allocation4 [shape = 's32[1]{0}', space=sflag, size = 0x4, scoped, tag = 'scoped memory for tpu_custom_call.1']
    #allocation5 [shape = 'u8[8192]{0}', space=vmem, size = 0x2000, scoped, tag = 'output window, operand 0, single buffered']
    %6 = vsyncpa [#allocation3], 0
    %7 = vsyncpa [#allocation4], 0
    // Predicated region
    $region2: #{tpu_custom_call.1} parent=1 // pred_check
      _
    $region3: #{tpu_custom_call.1} parent=1 // pred_check_branch
      %9 = sbr.rel (0) target = $region5
    $region4: #{tpu_custom_call.1} parent=1 // pred_region
      %11 = vsyncadd [#allocation3], 0
      %s13 = sshll.u32 %s0, 4
      %s14 = int_to_ptr.hbm [resolvable:$true] %s13
      %s15 = sshll.u32 [#allocation2], 4
      %s16 = int_to_ptr.vmem [resolvable:$true] %s15
      %18 = dma.hbm_to_vmem [thread:$0]  %s14, 256, %s16, [#allocation3]
    $region5: #{tpu_custom_call.1} parent=1 // pred_fallthru
      _
    // Predicated region
    $region6: #{tpu_custom_call.1} parent=1 // pred_check
      _
    $region7: #{tpu_custom_call.1} parent=1 // pred_check_branch
      %20 = sbr.rel (0) target = $region9
    $region8: #{tpu_custom_call.1} parent=1 // pred_region
      %22 = dma.done [#allocation3], 256
    $region9: #{tpu_custom_call.1} parent=1 // pred_fallthru
      _
    %v23 = vld [vmem:[#allocation2] sm:$0xff]
    %v24 = vld [vmem:[#allocation2 + $0x8] sm:$0xff]
    %v25 = vadd.f32 %v23, 3.0
    %v26 = vadd.f32 %v24, 3.0
    %v27 = vmax.f32 %v25, 0.0
    %v28 = vmax.f32 %v26, 0.0
    %v29 = vmin.f32 %v27, 6.0
    %v30 = vmin.f32 %v28, 6.0
    %v31 = vmul.f32 %v23, %v29
    %v32 = vmul.f32 %v24, %v30
    %v33 = vmul.f32 %v31, 0.16666667
    %v34 = vmul.f32 %v32, 0.16666667
    %35 = vst [vmem:[#allocation5] sm:$0xff] %v33
    %36 = vst [vmem:[#allocation5 + $0x8] sm:$0xff] %v34
    // Predicated region
    $region10: #{tpu_custom_call.1} parent=1 // pred_check
      _
    $region11: #{tpu_custom_call.1} parent=1 // pred_check_branch
      %38 = sbr.rel (0) target = $region13
    $region12: #{tpu_custom_call.1} parent=1 // pred_region
      %40 = vsyncadd [#allocation4], 0
      %s42 = sshll.u32 [#allocation5], 4
      %s43 = int_to_ptr.vmem [resolvable:$true] %s42
      %s44 = sshll.u32 %s1, 4
      %s45 = int_to_ptr.hbm [resolvable:$true] %s44
      %47 = dma.vmem_to_hbm [thread:$0]  %s43, 256, %s45, [#allocation4]
    $region13: #{tpu_custom_call.1} parent=1 // pred_fallthru
      _
    // Predicated region
    $region14: #{tpu_custom_call.1} parent=1 // pred_check
      _
    $region15: #{tpu_custom_call.1} parent=1 // pred_check_branch
      %49 = sbr.rel (0) target = $region17
    $region16: #{tpu_custom_call.1} parent=1 // pred_region
      %51 = dma.done [#allocation4], 256
    $region17: #{tpu_custom_call.1} parent=1 // pred_fallthru
      _
    %52 = vsyncpa [#allocation3], 1
    %53 = vsyncpa [#allocation4], 1

</llo_original>
